<compile_context>
chip_gen: v5e
topology: v5e:2x2
jax: 0.10.0
libtpu: 0.0.40
codegen_flags: <defaults>
</compile_context>

<pallas_src>
import jax
import jax.numpy as jnp
from jax import lax
from jax.experimental import pallas as pl
from jax.experimental.pallas import tpu as pltpu

_EPS = 1e-5


# ----------------------------- kernel helpers ------------------------------ #
def _silu(v):
    return v * jax.nn.sigmoid(v)


def _bn(v, gamma, beta):
    """Training-mode batch-norm over the token (row) axis; per-channel (lane) stats.
    One-pass sum / sum-of-squares; variance clamped at 0 against f32 cancellation."""
    inv = 1.0 / v.shape[0]
    s1 = jnp.sum(v, axis=0, keepdims=True)
    s2 = jnp.sum(v * v, axis=0, keepdims=True)
    mean = s1 * inv
    var = jnp.maximum(s2 * inv - mean * mean, 0.0)
    scale = gamma * lax.rsqrt(var + _EPS)
    shift = beta - mean * scale
    return v * scale + shift


# --------------------------------- kernel ---------------------------------- #
def _build_kernel(stride, n_tok_out, lout, identity):
    s = stride
    M = n_tok_out          # = N * Lout
    Lout = lout

    def kernel(x_ref, pcin_ref, pcout_ref, w1t_ref, w3_ref, w2t_ref, *rest):
        if identity:
            (out_ref,) = rest
            wdt_ref = None
        else:
            wdt_ref, out_ref = rest
        f32, bf16 = jnp.float32, jnp.bfloat16

        x_bf = x_ref[...]                      # (s*M, Cin) bf16, row = t*M + n*Lout + l'

        pcin = pcin_ref[...]                   # (2, Cin)  = [g1; be1]
        g1, be1 = pcin[0:1], pcin[1:2]
        pcout = pcout_ref[...]                 # (6, Cout) = [g3; be3; g2; be2; gd; bed]
        g3, be3, g2, be2 = pcout[0:1], pcout[1:2], pcout[2:3], pcout[3:4]

        # Batch-boundary masks from an in-kernel iota (no lane-padded (M,1) input DMAs).
        # f32 arithmetic with the +0.5 floor trick avoids vector integer div/rem and is
        # exact for any token count that fits in VMEM.
        r = lax.broadcasted_iota(jnp.int32, (M, 1), 0).astype(f32)
        lidx = r - jnp.floor((r + 0.5) / Lout) * Lout          # == row % Lout, exactly
        maskf = (lidx > 0.5).astype(f32)                       # 0 where l' == 0
        maskl = (lidx < Lout - 1.5).astype(f32)                # 0 where l' == Lout-1

        # ---- residual branch: 1x1 conv (stride s) + BN, or identity ----
        if identity:
            res = x_bf[:M].astype(f32)
        else:
            gd, bed = pcout[4:5], pcout[5:6]
            res = jnp.dot(x_bf[:M], wdt_ref[...], preferred_element_type=f32)
            res = _bn(res, gd, bed)

        # ---- conv1x1_1 + BN + SiLU over all s*M tokens (bias dropped: BN no-op) ----
        h1 = jnp.dot(x_bf, w1t_ref[...], preferred_element_type=f32)    # (s*M, Cin)
        h1 = _silu(_bn(h1, g1, be1))

        # ---- grouped conv3x3 (stride s, pad 1): 3 taps fused into one contraction ----
        bases = [h1[t * M:(t + 1) * M] for t in range(s)]

        def tap(k):
            off = k - 1                    # input offset relative to the tap centre
            t = off % s                    # intra-stride block (static)
            mshift = (off - t) // s        # -1, 0 or +1 output-position shift (static)
            base = bases[t]
            if mshift == 0:
                v = base
            elif mshift == -1:             # previous output position (zero at l' == 0)
                v = pltpu.roll(base, shift=1, axis=0) * maskf
            else:                          # next output position (zero at l' == Lout-1)
                v = pltpu.roll(base, shift=M - 1, axis=0) * maskl
            return v.astype(bf16)

        taps = jnp.concatenate([tap(0), tap(1), tap(2)], axis=1)        # (M, 3*Cin)
        y3 = jnp.dot(taps, w3_ref[...], preferred_element_type=f32)     # (M, Cout)
        h3 = _silu(_bn(y3, g3, be3)).astype(bf16)

        # ---- conv1x1_2 + BN ----
        h2 = jnp.dot(h3, w2t_ref[...], preferred_element_type=f32)
        h2 = _bn(h2, g2, be2)

        # ---- residual add + SiLU (single lane-dense (M, Cout) store) ----
        out_ref[...] = _silu(h2 + res)

    return kernel


# ----------------------------- VMEM budgeting ------------------------------- #
def _rup(v, m):
    return -(-v // m) * m


def _vmem_bytes(stride, M, Cin, Cout, identity):
    """Rough peak-VMEM estimate (bytes, lane padding included) for one invocation."""
    tok, cin_l, cout_l = stride * M, _rup(Cin, 128), _rup(Cout, 128)
    b = tok * cin_l * 2                        # x (bf16 input buffer)
    b += tok * cin_l * 4                       # h1 (f32)
    b += 2 * M * cin_l * 4                     # rolled / masked tap temporaries (f32)
    b += M * _rup(3 * Cin, 128) * 2            # fused tap concatenation (bf16)
    b += 3 * M * cout_l * 4 + M * cout_l * 2   # y3 / h2 / res (f32) + h3 (bf16)
    b += M * cout_l * 4                        # output buffer
    b += 2 * M * 128 * 4                       # (M, 1) boundary masks (lane padded)
    b += 2 * (_rup(Cin, 8) * cin_l + _rup(3 * Cin, 8) * cout_l
              + _rup(Cout, 8) * cout_l
              + (0 if identity else _rup(Cin, 8) * cout_l))   # bf16 weights
    b += 4 * (8 * cin_l + 8 * cout_l)          # packed BN parameters
    return b


# -------------------------------- wrapper ----------------------------------- #
def resnext_block(x, params):
    N, Cin, L = x.shape
    Cout = params["w2"].shape[0]
    stride = params["stride"]
    identity = (Cin == Cout)
    assert L % stride == 0, "kernel assumes the signal length is divisible by stride"
    Lout = L // stride
    M = N * Lout
    f32, bf16 = jnp.float32, jnp.bfloat16

    # Budget against v7x: 64 MiB VMEM per TensorCore.
    # TODO(synk): token-tile grid with split BN statistics once this budget is exceeded.
    vmem_need = _vmem_bytes(stride, M, Cin, Cout, identity)
    assert vmem_need <= 48 * 1024 * 1024, (
        f"problem needs ~{vmem_need >> 20} MiB VMEM; requires the token-tile grid")
    vmem_limit = int(min(max(vmem_need * 5 // 4 + (1 << 20), 16 << 20), 64 << 20))

    # Token layout: row = t*(N*Lout) + n*Lout + l'  <->  x[n, :, stride*l' + t], so the
    # conv3x3 taps are static row blocks inside the kernel; streamed as bf16.
    x_tok = (jnp.transpose(x.astype(bf16), (0, 2, 1))         # (N, L, Cin)
             .reshape(N, Lout, stride, Cin)
             .transpose(2, 0, 1, 3)                           # (stride, N, Lout, Cin)
             .reshape(stride * M, Cin))
    # TODO(synk): when stacking blocks, keep activations in this token layout across a
    #             whole stage so the input/output transposes are paid once per stage.

    def row(p):                                               # (C, 1) -> (1, C) f32
        return jnp.asarray(p, f32).reshape(1, -1)

    # Conv biases that feed straight into training-mode BN are exact no-ops -> dropped.
    pcin = jnp.concatenate([row(params["g1"]), row(params["be1"])], axis=0)
    pcout = jnp.concatenate([row(params["g3"]), row(params["be3"]),
                             row(params["g2"]), row(params["be2"]),
                             row(params["gd"]), row(params["bed"])], axis=0)

    w1t = params["w1"].T.astype(bf16)                                   # (Cin, Cin)
    w3cat = jnp.concatenate([params["w3full"][k].T for k in range(3)],
                            axis=0).astype(bf16)                        # (3*Cin, Cout)
    w2t = params["w2"].T.astype(bf16)                                   # (Cout, Cout)

    inputs = [x_tok, pcin, pcout, w1t, w3cat, w2t]
    if not identity:
        inputs.append(params["wd"].T.astype(bf16))                      # (Cin, Cout)

    vspec = pl.BlockSpec(memory_space=pltpu.MemorySpace.VMEM)
    out2d = pl.pallas_call(
        _build_kernel(stride, M, Lout, identity),
        out_shape=jax.ShapeDtypeStruct((M, Cout), f32),
        in_specs=[vspec] * len(inputs),
        out_specs=vspec,
        compiler_params=pltpu.CompilerParams(vmem_limit_bytes=vmem_limit),
    )(*inputs)

    # (N*Lout, Cout) -> (N, Cout, Lout)
    return jnp.transpose(out2d.reshape(N, Lout, Cout), (0, 2, 1))


# --------------------------- deterministic params --------------------------- #
def init_params(key, Cin, Cout, cardinality):
    assert Cout % Cin == 0 and Cin % cardinality == 0 and Cout % cardinality == 0
    stride = Cout // Cin
    ks = jax.random.split(key, 16)

    def rnd(k, shape):
        return jax.random.normal(k, shape, jnp.float32) * 0.1

    p = dict(
        stride=stride,
        w1=rnd(ks[0], (Cin, Cin)), b1=rnd(ks[1], (Cin, 1)),
        g1=1.0 + rnd(ks[2], (Cin, 1)), be1=rnd(ks[3], (Cin, 1)),
        w3=rnd(ks[4], (Cout, Cin // cardinality, 3)), b3=rnd(ks[5], (Cout, 1)),
        g3=1.0 + rnd(ks[6], (Cout, 1)), be3=rnd(ks[7], (Cout, 1)),
        w2=rnd(ks[8], (Cout, Cout)), b2=rnd(ks[9], (Cout, 1)),
        g2=1.0 + rnd(ks[10], (Cout, 1)), be2=rnd(ks[11], (Cout, 1)),
        wd=rnd(ks[12], (Cout, Cin)), bd=rnd(ks[13], (Cout, 1)),
        gd=1.0 + rnd(ks[14], (Cout, 1)), bed=rnd(ks[15], (Cout, 1)),
    )
    # Expand grouped conv weights (Cout, Cin/card, 3) into block-diagonal (3, Cout, Cin).
    og, ig = Cout // cardinality, Cin // cardinality
    w3full = jnp.zeros((3, Cout, Cin), jnp.float32)
    for g in range(cardinality):
        blk = jnp.transpose(p["w3"][g * og:(g + 1) * og], (2, 0, 1))  # (3, og, ig)
        w3full = w3full.at[:, g * og:(g + 1) * og, g * ig:(g + 1) * ig].set(blk)
    p["w3full"] = w3full
    return p


# -------------------------- pure-JAX reference ------------------------------ #
def reference(x, params, cardinality, identity):
    """Matched-precision reference: bf16 conv inputs/weights, f32 accumulation,
    f32 BatchNorm (batch statistics) / SiLU — same as the kernel."""
    stride = params["stride"]
    bf16 = jnp.bfloat16

    def bn(h, g, b):
        mean = jnp.mean(h, axis=(0, 2), keepdims=True)
        var = jnp.mean((h - mean) ** 2, axis=(0, 2), keepdims=True)
        return (h - mean) / jnp.sqrt(var + _EPS) * g.reshape(1, -1, 1) + b.reshape(1, -1, 1)

    def conv(h, w, b, stride=1, padding=0, groups=1):
        y = lax.conv_general_dilated(h.astype(bf16), w.astype(bf16), (stride,),
                                     [(padding, padding)],
                                     dimension_numbers=("NCH", "OIH", "NCH"),
                                     feature_group_count=groups,
                                     preferred_element_type=jnp.float32)
        return y + b.reshape(1, -1, 1)

    if identity:
        res = x
    else:
        res = bn(conv(x, params["wd"][:, :, None], params["bd"], stride=stride),
                 params["gd"], params["bed"])
    h = jax.nn.silu(bn(conv(x, params["w1"][:, :, None], params["b1"]),
                       params["g1"], params["be1"]))
    h = jax.nn.silu(bn(conv(h, params["w3"], params["b3"], stride=stride, padding=1,
                            groups=cardinality), params["g3"], params["be3"]))
    h = bn(conv(h, params["w2"][:, :, None], params["b2"]), params["g2"], params["be2"])
    return jax.nn.silu(h + res)


if __name__ == "__main__":
    key = jax.random.PRNGKey(0)
    k1, k2, k3, k4 = jax.random.split(key, 4)

    # Case 1: channel expansion -> stride-2 downsample branch.
    N, Cin, Cout, card, L = 2, 8, 16, 4, 16
    x = jax.random.normal(k1, (N, Cin, L), jnp.float32)
    params = init_params(k2, Cin, Cout, card)
    out = jax.block_until_ready(resnext_block(x, params))
    ref = reference(x, params, card, identity=False)
    assert out.shape == ref.shape, (out.shape, ref.shape)
    err1 = float(jnp.max(jnp.abs(out - ref)))
    assert err1 < 5e-2, f"case1 max abs err {err1}"

    # Case 2: identity residual (Cin == Cout, stride 1).
    N, Cin, Cout, card, L = 2, 16, 16, 4, 16
    x = jax.random.normal(k3, (N, Cin, L), jnp.float32)
    params = init_params(k4, Cin, Cout, card)
    out = jax.block_until_ready(resnext_block(x, params))
    ref = reference(x, params, card, identity=True)
    assert out.shape == ref.shape, (out.shape, ref.shape)
    err2 = float(jnp.max(jnp.abs(out - ref)))
    assert err2 < 5e-2, f"case2 max abs err {err2}"

    print("KERNEL_OK")
</pallas_src>

<mosaic_0001>
module attributes {stable_mosaic.version = 11 : i64} {
  func.func @kernel(%arg0: memref<32x8xbf16, #tpu.memory_space<vmem>>, %arg1: memref<2x8xf32, #tpu.memory_space<vmem>>, %arg2: memref<6x16xf32, #tpu.memory_space<vmem>>, %arg3: memref<8x8xbf16, #tpu.memory_space<vmem>>, %arg4: memref<24x16xbf16, #tpu.memory_space<vmem>>, %arg5: memref<16x16xbf16, #tpu.memory_space<vmem>>, %arg6: memref<8x16xbf16, #tpu.memory_space<vmem>>, %arg7: memref<16x16xf32, #tpu.memory_space<vmem>>) attributes {dimension_semantics = [], scalar_prefetch = 0 : i64, scratch_operands = 0 : i64, tpu.core_type = #tpu.core_type<tc>} {
    %c0 = arith.constant 0 : index
    %c0_0 = arith.constant 0 : index
    %0 = vector.load %arg0[%c0, %c0_0] : memref<32x8xbf16, #tpu.memory_space<vmem>>, vector<32x8xbf16>
    %c0_1 = arith.constant 0 : index
    %c0_2 = arith.constant 0 : index
    %1 = vector.load %arg1[%c0_1, %c0_2] : memref<2x8xf32, #tpu.memory_space<vmem>>, vector<2x8xf32>
    %2 = vector.extract_strided_slice %1 {offsets = [0, 0], sizes = [1, 8], strides = [1, 1]} : vector<2x8xf32> to vector<1x8xf32>
    %3 = vector.extract_strided_slice %1 {offsets = [1, 0], sizes = [1, 8], strides = [1, 1]} : vector<2x8xf32> to vector<1x8xf32>
    %c0_3 = arith.constant 0 : index
    %c0_4 = arith.constant 0 : index
    %4 = vector.load %arg2[%c0_3, %c0_4] : memref<6x16xf32, #tpu.memory_space<vmem>>, vector<6x16xf32>
    %5 = vector.extract_strided_slice %4 {offsets = [0, 0], sizes = [1, 16], strides = [1, 1]} : vector<6x16xf32> to vector<1x16xf32>
    %6 = vector.extract_strided_slice %4 {offsets = [1, 0], sizes = [1, 16], strides = [1, 1]} : vector<6x16xf32> to vector<1x16xf32>
    %7 = vector.extract_strided_slice %4 {offsets = [2, 0], sizes = [1, 16], strides = [1, 1]} : vector<6x16xf32> to vector<1x16xf32>
    %8 = vector.extract_strided_slice %4 {offsets = [3, 0], sizes = [1, 16], strides = [1, 1]} : vector<6x16xf32> to vector<1x16xf32>
    %9 = tpu.iota {dimensions = array<i32: 0>} : vector<16x1xi32>
    %10 = arith.sitofp %9 : vector<16x1xi32> to vector<16x1xf32>
    %cst = arith.constant 5.000000e-01 : f32
    %11 = vector.broadcast %cst : f32 to vector<16x1xf32>
    %12 = arith.addf %10, %11 : vector<16x1xf32>
    %cst_5 = arith.constant 8.000000e+00 : f32
    %13 = vector.broadcast %cst_5 : f32 to vector<16x1xf32>
    %14 = arith.divf %12, %13 : vector<16x1xf32>
    %15 = math.floor %14 : vector<16x1xf32>
    %cst_6 = arith.constant 8.000000e+00 : f32
    %16 = vector.broadcast %cst_6 : f32 to vector<16x1xf32>
    %17 = arith.mulf %15, %16 : vector<16x1xf32>
    %18 = arith.subf %10, %17 : vector<16x1xf32>
    %cst_7 = arith.constant 5.000000e-01 : f32
    %19 = vector.broadcast %cst_7 : f32 to vector<16x1xf32>
    %20 = arith.cmpf ogt, %18, %19 : vector<16x1xf32>
    %21 = arith.extui %20 : vector<16x1xi1> to vector<16x1xi32>
    %22 = arith.sitofp %21 : vector<16x1xi32> to vector<16x1xf32>
    %23 = vector.extract_strided_slice %4 {offsets = [4, 0], sizes = [1, 16], strides = [1, 1]} : vector<6x16xf32> to vector<1x16xf32>
    %24 = vector.extract_strided_slice %4 {offsets = [5, 0], sizes = [1, 16], strides = [1, 1]} : vector<6x16xf32> to vector<1x16xf32>
    %25 = vector.extract_strided_slice %0 {offsets = [0, 0], sizes = [16, 8], strides = [1, 1]} : vector<32x8xbf16> to vector<16x8xbf16>
    %c0_8 = arith.constant 0 : index
    %c0_9 = arith.constant 0 : index
    %26 = vector.load %arg6[%c0_8, %c0_9] : memref<8x16xbf16, #tpu.memory_space<vmem>>, vector<8x16xbf16>
    %cst_10 = arith.constant dense<0.000000e+00> : vector<16x16xf32>
    %27 = tpu.matmul %25, %26, %cst_10 {dimension_numbers = #tpu.dot_dimension_numbers<[1], [0], [0], [1], [0, 0, 1, 1], [], []>} : vector<16x8xbf16>, vector<8x16xbf16>, vector<16x16xf32> -> vector<16x16xf32>
    %cst_11 = arith.constant dense<0.000000e+00> : vector<16xf32>
    %28 = vector.multi_reduction <add>, %27, %cst_11 [0] : vector<16x16xf32> to vector<16xf32>
    %29 = vector.shape_cast %28 : vector<16xf32> to vector<1x16xf32>
    %30 = arith.mulf %27, %27 : vector<16x16xf32>
    %cst_12 = arith.constant dense<0.000000e+00> : vector<16xf32>
    %31 = vector.multi_reduction <add>, %30, %cst_12 [0] : vector<16x16xf32> to vector<16xf32>
    %32 = vector.shape_cast %31 : vector<16xf32> to vector<1x16xf32>
    %cst_13 = arith.constant 6.250000e-02 : f32
    %33 = vector.broadcast %cst_13 : f32 to vector<1x16xf32>
    %34 = arith.mulf %29, %33 : vector<1x16xf32>
    %cst_14 = arith.constant 6.250000e-02 : f32
    %35 = vector.broadcast %cst_14 : f32 to vector<1x16xf32>
    %36 = arith.mulf %32, %35 : vector<1x16xf32>
    %37 = arith.mulf %34, %34 : vector<1x16xf32>
    %38 = arith.subf %36, %37 : vector<1x16xf32>
    %cst_15 = arith.constant 0.000000e+00 : f32
    %39 = vector.broadcast %cst_15 : f32 to vector<1x16xf32>
    %40 = arith.maximumf %38, %39 : vector<1x16xf32>
    %cst_16 = arith.constant 9.99999974E-6 : f32
    %41 = vector.broadcast %cst_16 : f32 to vector<1x16xf32>
    %42 = arith.addf %40, %41 : vector<1x16xf32>
    %43 = math.rsqrt %42 : vector<1x16xf32>
    %44 = arith.mulf %23, %43 : vector<1x16xf32>
    %45 = arith.mulf %34, %44 : vector<1x16xf32>
    %46 = arith.subf %24, %45 : vector<1x16xf32>
    %47 = vector.broadcast %44 : vector<1x16xf32> to vector<16x16xf32>
    %48 = arith.mulf %27, %47 : vector<16x16xf32>
    %49 = vector.broadcast %46 : vector<1x16xf32> to vector<16x16xf32>
    %50 = arith.addf %48, %49 : vector<16x16xf32>
    %c0_17 = arith.constant 0 : index
    %c0_18 = arith.constant 0 : index
    %51 = vector.load %arg3[%c0_17, %c0_18] : memref<8x8xbf16, #tpu.memory_space<vmem>>, vector<8x8xbf16>
    %cst_19 = arith.constant dense<0.000000e+00> : vector<32x8xf32>
    %52 = tpu.matmul %0, %51, %cst_19 {dimension_numbers = #tpu.dot_dimension_numbers<[1], [0], [0], [1], [0, 0, 1, 1], [], []>} : vector<32x8xbf16>, vector<8x8xbf16>, vector<32x8xf32> -> vector<32x8xf32>
    %cst_20 = arith.constant dense<0.000000e+00> : vector<8xf32>
    %53 = vector.multi_reduction <add>, %52, %cst_20 [0] : vector<32x8xf32> to vector<8xf32>
    %54 = vector.shape_cast %53 : vector<8xf32> to vector<1x8xf32>
    %55 = arith.mulf %52, %52 : vector<32x8xf32>
    %cst_21 = arith.constant dense<0.000000e+00> : vector<8xf32>
    %56 = vector.multi_reduction <add>, %55, %cst_21 [0] : vector<32x8xf32> to vector<8xf32>
    %57 = vector.shape_cast %56 : vector<8xf32> to vector<1x8xf32>
    %cst_22 = arith.constant 3.125000e-02 : f32
    %58 = vector.broadcast %cst_22 : f32 to vector<1x8xf32>
    %59 = arith.mulf %54, %58 : vector<1x8xf32>
    %cst_23 = arith.constant 3.125000e-02 : f32
    %60 = vector.broadcast %cst_23 : f32 to vector<1x8xf32>
    %61 = arith.mulf %57, %60 : vector<1x8xf32>
    %62 = arith.mulf %59, %59 : vector<1x8xf32>
    %63 = arith.subf %61, %62 : vector<1x8xf32>
    %cst_24 = arith.constant 0.000000e+00 : f32
    %64 = vector.broadcast %cst_24 : f32 to vector<1x8xf32>
    %65 = arith.maximumf %63, %64 : vector<1x8xf32>
    %cst_25 = arith.constant 9.99999974E-6 : f32
    %66 = vector.broadcast %cst_25 : f32 to vector<1x8xf32>
    %67 = arith.addf %65, %66 : vector<1x8xf32>
    %68 = math.rsqrt %67 : vector<1x8xf32>
    %69 = arith.mulf %2, %68 : vector<1x8xf32>
    %70 = arith.mulf %59, %69 : vector<1x8xf32>
    %71 = arith.subf %3, %70 : vector<1x8xf32>
    %72 = vector.broadcast %69 : vector<1x8xf32> to vector<32x8xf32>
    %73 = arith.mulf %52, %72 : vector<32x8xf32>
    %74 = vector.broadcast %71 : vector<1x8xf32> to vector<32x8xf32>
    %75 = arith.addf %73, %74 : vector<32x8xf32>
    %76 = arith.negf %75 : vector<32x8xf32>
    %77 = math.exp %76 : vector<32x8xf32>
    %cst_26 = arith.constant 1.000000e+00 : f32
    %78 = vector.broadcast %cst_26 : f32 to vector<32x8xf32>
    %79 = arith.addf %78, %77 : vector<32x8xf32>
    %80 = arith.divf %78, %79 : vector<32x8xf32>
    %81 = arith.mulf %75, %80 : vector<32x8xf32>
    %82 = vector.extract_strided_slice %81 {offsets = [0, 0], sizes = [16, 8], strides = [1, 1]} : vector<32x8xf32> to vector<16x8xf32>
    %83 = vector.extract_strided_slice %81 {offsets = [16, 0], sizes = [16, 8], strides = [1, 1]} : vector<32x8xf32> to vector<16x8xf32>
    %c1_i32 = arith.constant 1 : i32
    %84 = tpu.dynamic_rotate %83 by %c1_i32 dim 0 : vector<16x8xf32>, i32 -> vector<16x8xf32>
    %85 = vector.broadcast %22 : vector<16x1xf32> to vector<16x8xf32>
    %86 = arith.mulf %84, %85 : vector<16x8xf32>
    %87 = arith.truncf %86 : vector<16x8xf32> to vector<16x8xbf16>
    %88 = arith.truncf %82 : vector<16x8xf32> to vector<16x8xbf16>
    %89 = arith.truncf %83 : vector<16x8xf32> to vector<16x8xbf16>
    %90 = tpu.concatenate %87, %88, %89 in 1 : vector<16x8xbf16>, vector<16x8xbf16>, vector<16x8xbf16> -> vector<16x24xbf16>
    %c0_27 = arith.constant 0 : index
    %c0_28 = arith.constant 0 : index
    %91 = vector.load %arg4[%c0_27, %c0_28] : memref<24x16xbf16, #tpu.memory_space<vmem>>, vector<24x16xbf16>
    %cst_29 = arith.constant dense<0.000000e+00> : vector<16x16xf32>
    %92 = tpu.matmul %90, %91, %cst_29 {dimension_numbers = #tpu.dot_dimension_numbers<[1], [0], [0], [1], [0, 0, 1, 1], [], []>} : vector<16x24xbf16>, vector<24x16xbf16>, vector<16x16xf32> -> vector<16x16xf32>
    %cst_30 = arith.constant dense<0.000000e+00> : vector<16xf32>
    %93 = vector.multi_reduction <add>, %92, %cst_30 [0] : vector<16x16xf32> to vector<16xf32>
    %94 = vector.shape_cast %93 : vector<16xf32> to vector<1x16xf32>
    %95 = arith.mulf %92, %92 : vector<16x16xf32>
    %cst_31 = arith.constant dense<0.000000e+00> : vector<16xf32>
    %96 = vector.multi_reduction <add>, %95, %cst_31 [0] : vector<16x16xf32> to vector<16xf32>
    %97 = vector.shape_cast %96 : vector<16xf32> to vector<1x16xf32>
    %cst_32 = arith.constant 6.250000e-02 : f32
    %98 = vector.broadcast %cst_32 : f32 to vector<1x16xf32>
    %99 = arith.mulf %94, %98 : vector<1x16xf32>
    %cst_33 = arith.constant 6.250000e-02 : f32
    %100 = vector.broadcast %cst_33 : f32 to vector<1x16xf32>
    %101 = arith.mulf %97, %100 : vector<1x16xf32>
    %102 = arith.mulf %99, %99 : vector<1x16xf32>
    %103 = arith.subf %101, %102 : vector<1x16xf32>
    %cst_34 = arith.constant 0.000000e+00 : f32
    %104 = vector.broadcast %cst_34 : f32 to vector<1x16xf32>
    %105 = arith.maximumf %103, %104 : vector<1x16xf32>
    %cst_35 = arith.constant 9.99999974E-6 : f32
    %106 = vector.broadcast %cst_35 : f32 to vector<1x16xf32>
    %107 = arith.addf %105, %106 : vector<1x16xf32>
    %108 = math.rsqrt %107 : vector<1x16xf32>
    %109 = arith.mulf %5, %108 : vector<1x16xf32>
    %110 = arith.mulf %99, %109 : vector<1x16xf32>
    %111 = arith.subf %6, %110 : vector<1x16xf32>
    %112 = vector.broadcast %109 : vector<1x16xf32> to vector<16x16xf32>
    %113 = arith.mulf %92, %112 : vector<16x16xf32>
    %114 = vector.broadcast %111 : vector<1x16xf32> to vector<16x16xf32>
    %115 = arith.addf %113, %114 : vector<16x16xf32>
    %116 = arith.negf %115 : vector<16x16xf32>
    %117 = math.exp %116 : vector<16x16xf32>
    %cst_36 = arith.constant 1.000000e+00 : f32
    %118 = vector.broadcast %cst_36 : f32 to vector<16x16xf32>
    %119 = arith.addf %118, %117 : vector<16x16xf32>
    %120 = arith.divf %118, %119 : vector<16x16xf32>
    %121 = arith.mulf %115, %120 : vector<16x16xf32>
    %122 = arith.truncf %121 : vector<16x16xf32> to vector<16x16xbf16>
    %c0_37 = arith.constant 0 : index
    %c0_38 = arith.constant 0 : index
    %123 = vector.load %arg5[%c0_37, %c0_38] : memref<16x16xbf16, #tpu.memory_space<vmem>>, vector<16x16xbf16>
    %cst_39 = arith.constant dense<0.000000e+00> : vector<16x16xf32>
    %124 = tpu.matmul %122, %123, %cst_39 {dimension_numbers = #tpu.dot_dimension_numbers<[1], [0], [0], [1], [0, 0, 1, 1], [], []>} : vector<16x16xbf16>, vector<16x16xbf16>, vector<16x16xf32> -> vector<16x16xf32>
    %cst_40 = arith.constant dense<0.000000e+00> : vector<16xf32>
    %125 = vector.multi_reduction <add>, %124, %cst_40 [0] : vector<16x16xf32> to vector<16xf32>
    %126 = vector.shape_cast %125 : vector<16xf32> to vector<1x16xf32>
    %127 = arith.mulf %124, %124 : vector<16x16xf32>
    %cst_41 = arith.constant dense<0.000000e+00> : vector<16xf32>
    %128 = vector.multi_reduction <add>, %127, %cst_41 [0] : vector<16x16xf32> to vector<16xf32>
    %129 = vector.shape_cast %128 : vector<16xf32> to vector<1x16xf32>
    %cst_42 = arith.constant 6.250000e-02 : f32
    %130 = vector.broadcast %cst_42 : f32 to vector<1x16xf32>
    %131 = arith.mulf %126, %130 : vector<1x16xf32>
    %cst_43 = arith.constant 6.250000e-02 : f32
    %132 = vector.broadcast %cst_43 : f32 to vector<1x16xf32>
    %133 = arith.mulf %129, %132 : vector<1x16xf32>
    %134 = arith.mulf %131, %131 : vector<1x16xf32>
    %135 = arith.subf %133, %134 : vector<1x16xf32>
    %cst_44 = arith.constant 0.000000e+00 : f32
    %136 = vector.broadcast %cst_44 : f32 to vector<1x16xf32>
    %137 = arith.maximumf %135, %136 : vector<1x16xf32>
    %cst_45 = arith.constant 9.99999974E-6 : f32
    %138 = vector.broadcast %cst_45 : f32 to vector<1x16xf32>
    %139 = arith.addf %137, %138 : vector<1x16xf32>
    %140 = math.rsqrt %139 : vector<1x16xf32>
    %141 = arith.mulf %7, %140 : vector<1x16xf32>
    %142 = arith.mulf %131, %141 : vector<1x16xf32>
    %143 = arith.subf %8, %142 : vector<1x16xf32>
    %144 = vector.broadcast %141 : vector<1x16xf32> to vector<16x16xf32>
    %145 = arith.mulf %124, %144 : vector<16x16xf32>
    %146 = vector.broadcast %143 : vector<1x16xf32> to vector<16x16xf32>
    %147 = arith.addf %145, %146 : vector<16x16xf32>
    %148 = arith.addf %147, %50 : vector<16x16xf32>
    %149 = arith.negf %148 : vector<16x16xf32>
    %150 = math.exp %149 : vector<16x16xf32>
    %cst_46 = arith.constant 1.000000e+00 : f32
    %151 = vector.broadcast %cst_46 : f32 to vector<16x16xf32>
    %152 = arith.addf %151, %150 : vector<16x16xf32>
    %153 = arith.divf %151, %152 : vector<16x16xf32>
    %154 = arith.mulf %148, %153 : vector<16x16xf32>
    %c0_47 = arith.constant 0 : index
    %c0_48 = arith.constant 0 : index
    %155 = vector.load %arg7[%c0_47, %c0_48] : memref<16x16xf32, #tpu.memory_space<vmem>>, vector<16x16xf32>
    tpu.vector_store %arg7[%c0_47, %c0_48], %154 {strides = array<i32>} : memref<16x16xf32, #tpu.memory_space<vmem>>, vector<16x16xf32>,
    return
  }
}

</mosaic_0001>

<llo_original>
// kernel: tpu_custom_call.1
$region0: #{tpu_custom_call.1}
  #allocation0 [shape = 'u32[]', space=smem, size = 0x4, offset = 0x4, fixed_abs, tag = 'smem constant byte address 0x4 - core index']
  #allocation1 [shape = 'u32[72,128]{1,0:T(1,128)}', space=vmem, size = 0x9000, scoped, tag = 'internal scratch']
  %s0 = inlined_call_operand.vmem [shape: bf16[32,8], index: 0, kind: input, shape index: {}]
  %s1 = inlined_call_operand.vmem [shape: f32[2,8], index: 1, kind: input, shape index: {}]
  %s2 = inlined_call_operand.vmem [shape: f32[6,16], index: 2, kind: input, shape index: {}]
  %s3 = inlined_call_operand.vmem [shape: bf16[8,8], index: 3, kind: input, shape index: {}]
  %s4 = inlined_call_operand.vmem [shape: bf16[24,16], index: 4, kind: input, shape index: {}]
  %s5 = inlined_call_operand.vmem [shape: bf16[16,16], index: 5, kind: input, shape index: {}]
  %s6 = inlined_call_operand.vmem [shape: bf16[8,16], index: 6, kind: input, shape index: {}]
  %s7 = inlined_call_operand.hbm [shape: f32[16,16], index: 7, kind: output, shape index: {}]
  %s8 = sld [smem:[#allocation0]]
  $region38: #{tpu_custom_call.1} parent=0
    _
  %s10 = ssub.s32 1, %s8
  %s11 = scalar_select 0, %s10, %s8
  $region1: #{tpu_custom_call.1} parent=0
    #allocation2 [shape = 'u8[8192]{0}', space=vmem, size = 0x2000, scoped, tag = 'output window, operand 0, single buffered']
    #allocation3 [shape = 's32[1]{0}', space=sflag, size = 0x4, scoped, tag = 'scoped memory for tpu_custom_call.1']
    %12 = vsyncpa [#allocation3], 0
    // Predicated region
    $region2: #{tpu_custom_call.1} parent=1 // pred_check
      _
    $region3: #{tpu_custom_call.1} parent=1 // pred_check_branch
      %14 = sbr.rel (0) target = $region5
    $region4: #{tpu_custom_call.1} parent=1 // pred_region
      _
    $region5: #{tpu_custom_call.1} parent=1 // pred_fallthru
      _
    // Predicated region
    $region6: #{tpu_custom_call.1} parent=1 // pred_check
      _
    $region7: #{tpu_custom_call.1} parent=1 // pred_check_branch
      %16 = sbr.rel (0) target = $region9
    $region8: #{tpu_custom_call.1} parent=1 // pred_region
      _
    $region9: #{tpu_custom_call.1} parent=1 // pred_fallthru
      _
    // Predicated region
    $region10: #{tpu_custom_call.1} parent=1 // pred_check
      _
    $region11: #{tpu_custom_call.1} parent=1 // pred_check_branch
      %18 = sbr.rel (0) target = $region13
    $region12: #{tpu_custom_call.1} parent=1 // pred_region
      _
    $region13: #{tpu_custom_call.1} parent=1 // pred_fallthru
      _
    // Predicated region
    $region14: #{tpu_custom_call.1} parent=1 // pred_check
      _
    $region15: #{tpu_custom_call.1} parent=1 // pred_check_branch
      %20 = sbr.rel (0) target = $region17
    $region16: #{tpu_custom_call.1} parent=1 // pred_region
      _
    $region17: #{tpu_custom_call.1} parent=1 // pred_fallthru
      _
    // Predicated region
    $region18: #{tpu_custom_call.1} parent=1 // pred_check
      _
    $region19: #{tpu_custom_call.1} parent=1 // pred_check_branch
      %22 = sbr.rel (0) target = $region21
    $region20: #{tpu_custom_call.1} parent=1 // pred_region
      _
    $region21: #{tpu_custom_call.1} parent=1 // pred_fallthru
      _
    // Predicated region
    $region22: #{tpu_custom_call.1} parent=1 // pred_check
      _
    $region23: #{tpu_custom_call.1} parent=1 // pred_check_branch
      %24 = sbr.rel (0) target = $region25
    $region24: #{tpu_custom_call.1} parent=1 // pred_region
      _
    $region25: #{tpu_custom_call.1} parent=1 // pred_fallthru
      _
    // Predicated region
    $region26: #{tpu_custom_call.1} parent=1 // pred_check
      _
    $region27: #{tpu_custom_call.1} parent=1 // pred_check_branch
      %26 = sbr.rel (0) target = $region29
    $region28: #{tpu_custom_call.1} parent=1 // pred_region
      _
    $region29: #{tpu_custom_call.1} parent=1 // pred_fallthru
      _
    %v28 = vld [vmem:[%s0] sm:$0xf]
    %v29 = vld [vmem:[%s0 + $0x4] sm:$0xf]
    %v30 = vld [vmem:[%s0 + $0x8] sm:$0xf]
    %v31 = vld [vmem:[%s0 + $0xc] sm:$0xf]
    %v32 = vld [vmem:[%s1] sm:$0x3]
    %v33 = vld [vmem:[%s2] sm:$0x3f]
    %v34 = vlaneseq
    %v35 = vshrl.u32 %v34, 7
    %v36 = vadd.s32 %v35, 8
    %v37 = vcvt.s32.f32 %v35
    %v38 = vcvt.s32.f32 %v36
    %v39 = vadd.f32 %v37, 0.5
    %v40 = vadd.f32 %v38, 0.5
    %v41 = vrcp.pop 8.0
    %v42 = vmul.f32 8.0, %v41
    %v43 = vsub.f32 1.0, %v42
    %v44 = vmul.f32 %v41, %v43
    %v45 = vadd.f32 %v41, %v44
    %vm46 = vweird.f32 %v41
    %v47 = vsel %vm46, %v41, %v45
    %v48 = vmul.f32 %v39, %v47
    %v49 = vmul.f32 %v40, %v47
    %v50 = vfloor.f32 %v48
    %v51 = vfloor.f32 %v49
    %v52 = vmul.f32 %v50, 8.0
    %v53 = vmul.f32 %v51, 8.0
    %v54 = vsub.f32 %v37, %v52
    %v55 = vsub.f32 %v38, %v53
    %vm56 = vcmp.gt.f32.partialorder %v54, 0.5
    %vm57 = vcmp.gt.f32.partialorder %v55, 0.5
    %v58 = vsel %vm56, 1, 0
    %v59 = vsel %vm57, 1, 0
    %v60 = vcvt.s32.f32 %v58
    %v61 = vcvt.s32.f32 %v59
    %v62 = vld [vmem:[%s6] sm:$0xf]
    %v65 = vunpack.c.l.b16 %v28
    %v66 = vunpack.c.l.b16 %v29
    %v67 = vpack.c.b16 %v66, %v65
    %vm68 = vcmask 64512
    %v70 = vsel %vm68, %v67, 0
    %vm72 = vcmask 1043456
    %v74 = vsel %vm72, %v62, 0
    %76 = vmatpush.bf16.msra.mxu0 0
    %77 = vmatpush.bf16.msra.mxu0 0
    %78 = vmatpush.bf16.msra.mxu0 0
    %79 = vmatpush.bf16.msra.mxu0 0
    %80 = vmatpush.bf16.msra.mxu0 0
    %81 = vmatpush.bf16.msra.mxu0 0
    %82 = vmatpush.bf16.msra.mxu0 0
    %83 = vmatpush.bf16.msra.mxu0 %v74
    %84 = vmatmul.bf16.gmra.mxu0 %v70
    %v85 = vpop.f32.mrf.mxu0
    %v86 = vadd.f32 0.0, %v85
    %v87 = vpop.f32.mrf.mxu0
    %v88 = vadd.f32 0.0, %v87
    %89 = vdwg.mxu0
    %vm90 = vcmask 130048
    %v91 = vsel %vm90, %v86, 0.0
    %v92 = vsel %vm90, %v88, 0.0
    %v93 = vadd.f32 %v91, %v92
    %v94 = vrot.slane %v93, 4
    %v95 = vadd.f32 %v93, %v94
    %v96 = vrot.slane %v95, 2
    %v97 = vadd.f32 %v95, %v96
    %v98 = vrot.slane %v97, 1
    %v99 = vadd.f32 %v97, %v98
    %v100 = vmul.f32 %v86, %v86
    %v101 = vmul.f32 %v88, %v88
    %v102 = vsel %vm90, %v100, 0.0
    %v103 = vsel %vm90, %v101, 0.0
    %v104 = vadd.f32 %v102, %v103
    %v105 = vrot.slane %v104, 4
    %v106 = vadd.f32 %v104, %v105
    %v107 = vrot.slane %v106, 2
    %v108 = vadd.f32 %v106, %v107
    %v109 = vrot.slane %v108, 1
    %v110 = vadd.f32 %v108, %v109
    %v111 = vmul.f32 %v99, 0.0625
    %v112 = vmul.f32 %v110, 0.0625
    %v113 = vmul.f32 %v111, %v111
    %v114 = vsub.f32 %v112, %v113
    %v115 = vmax.f32 %v114, 0.0
    %v116 = vadd.f32 %v115, 1e-05
    %v117 = vrsqrt.pop %v116
    %v118 = vmul.f32 %v117, %v116
    %v119 = vmul.f32 %v118, %v117
    %v120 = vmul.f32 0.5, %v119
    %v121 = vsub.f32 1.5, %v120
    %v122 = vmul.f32 %v117, %v121
    %vm123 = vweird.f32 %v116
    %vm124 = vweird.f32 %v117
    %vm125 = vmor %vm123, %vm124
    %v126 = vsel %vm125, %v117, %v122
    %v127 = vmul.f32 %v33, %v126
    %v128 = vmul.f32 %v111, %v127
    %v130 = vrot.slane %v128, 7
    %v132 = vsub.f32 %v33, %v130
    %v133 = vperm.slane %v127, 4
    %v134 = vmul.f32 %v86, %v133
    %v135 = vmul.f32 %v88, %v133
    %v136 = vperm.slane %v132, 5
    %v137 = vadd.f32 %v134, %v136
    %v138 = vadd.f32 %v135, %v136
    %v139 = vld [vmem:[%s3] sm:$0xf]
    %v142 = vunpack.c.l.b16 %v30
    %v143 = vunpack.c.l.b16 %v31
    %v144 = vpack.c.b16 %v143, %v142
    %v146 = vsel %vm68, %v144, 0
    %v149 = vsel %vm72, %v139, 0
    %151 = vmatpush.bf16.msra.mxu0 0
    %152 = vmatpush.bf16.msra.mxu0 0
    %153 = vmatpush.bf16.msra.mxu0 0
    %154 = vmatpush.bf16.msra.mxu0 0
    %155 = vmatpush.bf16.msra.mxu0 0
    %156 = vmatpush.bf16.msra.mxu0 0
    %157 = vmatpush.bf16.msra.mxu0 0
    %158 = vmatpush.bf16.msra.mxu0 %v149
    %159 = vmatmul.bf16.gmra.mxu0 %v70
    %v160 = vpop.f32.mrf.mxu0
    %v161 = vadd.f32 0.0, %v160
    %v162 = vpop.f32.mrf.mxu0
    %v163 = vadd.f32 0.0, %v162
    %164 = vmatmul.bf16.gmra.mxu0 %v146
    %v165 = vpop.f32.mrf.mxu0
    %v166 = vadd.f32 0.0, %v165
    %v167 = vpop.f32.mrf.mxu0
    %v168 = vadd.f32 0.0, %v167
    %169 = vdwg.mxu0
    %v170 = vsel %vm68, %v161, 0.0
    %v171 = vsel %vm68, %v163, 0.0
    %v172 = vadd.f32 %v170, %v171
    %v173 = vsel %vm68, %v166, 0.0
    %v174 = vadd.f32 %v172, %v173
    %v175 = vsel %vm68, %v168, 0.0
    %v176 = vadd.f32 %v174, %v175
    %v177 = vrot.slane %v176, 4
    %v178 = vadd.f32 %v176, %v177
    %v179 = vrot.slane %v178, 2
    %v180 = vadd.f32 %v178, %v179
    %v181 = vrot.slane %v180, 1
    %v182 = vadd.f32 %v180, %v181
    %v183 = vmul.f32 %v161, %v161
    %v184 = vmul.f32 %v163, %v163
    %v185 = vmul.f32 %v166, %v166
    %v186 = vmul.f32 %v168, %v168
    %v187 = vsel %vm68, %v183, 0.0
    %v188 = vsel %vm68, %v184, 0.0
    %v189 = vadd.f32 %v187, %v188
    %v190 = vsel %vm68, %v185, 0.0
    %v191 = vadd.f32 %v189, %v190
    %v192 = vsel %vm68, %v186, 0.0
    %v193 = vadd.f32 %v191, %v192
    %v194 = vrot.slane %v193, 4
    %v195 = vadd.f32 %v193, %v194
    %v196 = vrot.slane %v195, 2
    %v197 = vadd.f32 %v195, %v196
    %v198 = vrot.slane %v197, 1
    %v199 = vadd.f32 %v197, %v198
    %v200 = vmul.f32 %v182, 0.03125
    %v201 = vmul.f32 %v199, 0.03125
    %v202 = vmul.f32 %v200, %v200
    %v203 = vsub.f32 %v201, %v202
    %v204 = vmax.f32 %v203, 0.0
    %v205 = vadd.f32 %v204, 1e-05
    %v206 = vrsqrt.pop %v205
    %v207 = vmul.f32 %v206, %v205
    %v208 = vmul.f32 %v207, %v206
    %v209 = vmul.f32 0.5, %v208
    %v210 = vsub.f32 1.5, %v209
    %v211 = vmul.f32 %v206, %v210
    %vm212 = vweird.f32 %v205
    %vm213 = vweird.f32 %v206
    %vm214 = vmor %vm212, %vm213
    %v215 = vsel %vm214, %v206, %v211
    %v216 = vmul.f32 %v32, %v215
    %v217 = vmul.f32 %v200, %v216
    %v219 = vrot.slane %v217, 7
    %v221 = vsub.f32 %v32, %v219
    %v222 = vperm.slane %v216, 0
    %v223 = vmul.f32 %v161, %v222
    %v224 = vmul.f32 %v163, %v222
    %v225 = vmul.f32 %v166, %v222
    %v226 = vmul.f32 %v168, %v222
    %v227 = vperm.slane %v221, 1
    %v228 = vadd.f32 %v223, %v227
    %v229 = vadd.f32 %v224, %v227
    %v230 = vadd.f32 %v225, %v227
    %v231 = vadd.f32 %v226, %v227
    %v232 = vxor.u32 %v228, 2147483648
    %v233 = vxor.u32 %v229, 2147483648
    %v234 = vxor.u32 %v230, 2147483648
    %v235 = vxor.u32 %v231, 2147483648
    %v236 = vmul.f32 %v232, 1.442695
    %v237 = vpow.pop %v236
    %v238 = vmul.f32 %v233, 1.442695
    %v239 = vpow.pop %v238
    %v240 = vmul.f32 %v234, 1.442695
    %v241 = vpow.pop %v240
    %v242 = vmul.f32 %v235, 1.442695
    %v243 = vpow.pop %v242
    %v244 = vadd.f32 %v237, 1.0
    %v245 = vadd.f32 %v239, 1.0
    %v246 = vadd.f32 %v241, 1.0
    %v247 = vadd.f32 %v243, 1.0
    %v248 = vrcp.pop %v244
    %v249 = vmul.f32 %v244, %v248
    %v250 = vsub.f32 1.0, %v249
    %v251 = vmul.f32 %v248, %v250
    %v252 = vadd.f32 %v248, %v251
    %vm253 = vweird.f32 %v244
    %vm254 = vweird.f32 %v248
    %vm255 = vmor %vm253, %vm254
    %v256 = vsel %vm255, %v248, %v252
    %v257 = vand.u32 2147483647, %v244
    %vm258 = vcmp.eq.f32.partialorder %v257, 8.507059e+37
    %v259 = vand.u32 %v244, 2147483648
    %v260 = vor.u32 1.1754944e-38, %v259
    %v261 = vsel %vm258, %v260, %v256
    %v262 = vmul.f32 1.0, %v261
    %v263 = vrcp.pop %v245
    %v264 = vmul.f32 %v245, %v263
    %v265 = vsub.f32 1.0, %v264
    %v266 = vmul.f32 %v263, %v265
    %v267 = vadd.f32 %v263, %v266
    %vm268 = vweird.f32 %v245
    %vm269 = vweird.f32 %v263
    %vm270 = vmor %vm268, %vm269
    %v271 = vsel %vm270, %v263, %v267
    %v272 = vand.u32 2147483647, %v245
    %vm273 = vcmp.eq.f32.partialorder %v272, 8.507059e+37
    %v274 = vand.u32 %v245, 2147483648
    %v275 = vor.u32 1.1754944e-38, %v274
    %v276 = vsel %vm273, %v275, %v271
    %v277 = vmul.f32 1.0, %v276
    %v278 = vrcp.pop %v246
    %v279 = vmul.f32 %v246, %v278
    %v280 = vsub.f32 1.0, %v279
    %v281 = vmul.f32 %v278, %v280
    %v282 = vadd.f32 %v278, %v281
    %vm283 = vweird.f32 %v246
    %vm284 = vweird.f32 %v278
    %vm285 = vmor %vm283, %vm284
    %v286 = vsel %vm285, %v278, %v282
    %v287 = vand.u32 2147483647, %v246
    %vm288 = vcmp.eq.f32.partialorder %v287, 8.507059e+37
    %v289 = vand.u32 %v246, 2147483648
    %v290 = vor.u32 1.1754944e-38, %v289
    %v291 = vsel %vm288, %v290, %v286
    %v292 = vmul.f32 1.0, %v291
    %v293 = vrcp.pop %v247
    %v294 = vmul.f32 %v247, %v293
    %v295 = vsub.f32 1.0, %v294
    %v296 = vmul.f32 %v293, %v295
    %v297 = vadd.f32 %v293, %v296
    %vm298 = vweird.f32 %v247
    %vm299 = vweird.f32 %v293
    %vm300 = vmor %vm298, %vm299
    %v301 = vsel %vm300, %v293, %v297
    %v302 = vand.u32 2147483647, %v247
    %vm303 = vcmp.eq.f32.partialorder %v302, 8.507059e+37
    %v304 = vand.u32 %v247, 2147483648
    %v305 = vor.u32 1.1754944e-38, %v304
    %v306 = vsel %vm303, %v305, %v301
    %v307 = vmul.f32 1.0, %v306
    %v308 = vmul.f32 %v228, %v262
    %v309 = vmul.f32 %v229, %v277
    %v310 = vmul.f32 %v230, %v292
    %v311 = vmul.f32 %v231, %v307
    %v312 = vrot.slane %v310, 7
    %v313 = vrot.slane %v311, 7
    %vm314 = vcmp.lt.s32.totalorder %v35, 1
    %v315 = vsel %vm314, %v312, %v313
    %v316 = vsel %vm314, %v313, %v312
    %v317 = vmul.f32 %v316, %v60
    %v318 = vmul.f32 %v315, %v61
    %v319 = vpack.c.bf16 %v317, %v317
    %v320 = vpack.c.bf16 %v318, %v318
    %v321 = vpack.c.bf16 %v308, %v308
    %v322 = vpack.c.bf16 %v309, %v309
    %v323 = vpack.c.bf16 %v310, %v310
    %v324 = vpack.c.bf16 %v311, %v311
    %v327 = vunpack.c.l.b16 %v319
    %v328 = vunpack.c.l.b16 %v320
    %v329 = vpack.c.b16 %v328, %v327
    %v332 = vunpack.c.l.b16 %v321
    %v333 = vunpack.c.l.b16 %v322
    %v334 = vpack.c.b16 %v333, %v332
    %335 = vrot.lane.b32.xlu0 %v334, 8
    %v336 = vpop.permute.xlu0 %335
    %v339 = vunpack.c.l.b16 %v323
    %v340 = vunpack.c.l.b16 %v324
    %v341 = vpack.c.b16 %v340, %v339
    %342 = vrot.lane.b32.xlu0 %v341, 16
    %v343 = vpop.permute.xlu0 %342
    %v346 = vsel %vm68, %v329, %v336
    %v348 = vsel %vm90, %v346, %v343
    %v349 = vld [vmem:[%s4] sm:$0xf]
    %v350 = vld [vmem:[%s4 + $0x4] sm:$0xf]
    %v351 = vld [vmem:[%s4 + $0x8] sm:$0xf]
    %v355 = vunpack.c.l.b16 %v349
    %v356 = vunpack.c.l.b16 %v350
    %v357 = vunpack.c.l.b16 %v351
    %v358 = vpack.c.b16 %v356, %v355
    %v359 = vpack.c.b16 %v357, %v357
    %vm361 = vcmask 195584
    %v362 = vsel %vm361, %v348, 0
    %v365 = vsel %vm72, %v359, 0
    %367 = vmatpush.bf16.msra.mxu0 0
    %368 = vmatpush.bf16.msra.mxu0 0
    %369 = vmatpush.bf16.msra.mxu0 0
    %370 = vmatpush.bf16.msra.mxu0 0
    %371 = vmatpush.bf16.msra.mxu0 0
    %372 = vmatpush.bf16.msra.mxu0 0
    %373 = vmatpush.bf16.msra.mxu0 %v365
    %374 = vmatpush.bf16.msra.mxu0 %v358
    %375 = vmatmul.bf16.gmra.mxu0 %v362
    %v376 = vpop.f32.mrf.mxu0
    %v377 = vadd.f32 0.0, %v376
    %v378 = vpop.f32.mrf.mxu0
    %v379 = vadd.f32 0.0, %v378
    %380 = vdwg.mxu0
    %v381 = vsel %vm90, %v377, 0.0
    %v382 = vsel %vm90, %v379, 0.0
    %v383 = vadd.f32 %v381, %v382
    %v384 = vrot.slane %v383, 4
    %v385 = vadd.f32 %v383, %v384
    %v386 = vrot.slane %v385, 2
    %v387 = vadd.f32 %v385, %v386
    %v388 = vrot.slane %v387, 1
    %v389 = vadd.f32 %v387, %v388
    %v390 = vmul.f32 %v377, %v377
    %v391 = vmul.f32 %v379, %v379
    %v392 = vsel %vm90, %v390, 0.0
    %v393 = vsel %vm90, %v391, 0.0
    %v394 = vadd.f32 %v392, %v393
    %v395 = vrot.slane %v394, 4
    %v396 = vadd.f32 %v394, %v395
    %v397 = vrot.slane %v396, 2
    %v398 = vadd.f32 %v396, %v397
    %v399 = vrot.slane %v398, 1
    %v400 = vadd.f32 %v398, %v399
    %v401 = vmul.f32 %v389, 0.0625
    %v402 = vmul.f32 %v400, 0.0625
    %v403 = vmul.f32 %v401, %v401
    %v404 = vsub.f32 %v402, %v403
    %v405 = vmax.f32 %v404, 0.0
    %v406 = vadd.f32 %v405, 1e-05
    %v407 = vrsqrt.pop %v406
    %v408 = vmul.f32 %v407, %v406
    %v409 = vmul.f32 %v408, %v407
    %v410 = vmul.f32 0.5, %v409
    %v411 = vsub.f32 1.5, %v410
    %v412 = vmul.f32 %v407, %v411
    %vm413 = vweird.f32 %v406
    %vm414 = vweird.f32 %v407
    %vm415 = vmor %vm413, %vm414
    %v416 = vsel %vm415, %v407, %v412
    %v417 = vmul.f32 %v33, %v416
    %v418 = vmul.f32 %v401, %v417
    %v420 = vrot.slane %v418, 7
    %v422 = vsub.f32 %v33, %v420
    %v423 = vperm.slane %v417, 0
    %v424 = vmul.f32 %v377, %v423
    %v425 = vmul.f32 %v379, %v423
    %v426 = vperm.slane %v422, 1
    %v427 = vadd.f32 %v424, %v426
    %v428 = vadd.f32 %v425, %v426
    %v429 = vxor.u32 %v427, 2147483648
    %v430 = vxor.u32 %v428, 2147483648
    %v431 = vmul.f32 %v429, 1.442695
    %v432 = vpow.pop %v431
    %v433 = vmul.f32 %v430, 1.442695
    %v434 = vpow.pop %v433
    %v435 = vadd.f32 %v432, 1.0
    %v436 = vadd.f32 %v434, 1.0
    %v437 = vrcp.pop %v435
    %v438 = vmul.f32 %v435, %v437
    %v439 = vsub.f32 1.0, %v438
    %v440 = vmul.f32 %v437, %v439
    %v441 = vadd.f32 %v437, %v440
    %vm442 = vweird.f32 %v435
    %vm443 = vweird.f32 %v437
    %vm444 = vmor %vm442, %vm443
    %v445 = vsel %vm444, %v437, %v441
    %v446 = vand.u32 2147483647, %v435
    %vm447 = vcmp.eq.f32.partialorder %v446, 8.507059e+37
    %v448 = vand.u32 %v435, 2147483648
    %v449 = vor.u32 1.1754944e-38, %v448
    %v450 = vsel %vm447, %v449, %v445
    %v451 = vmul.f32 1.0, %v450
    %v452 = vrcp.pop %v436
    %v453 = vmul.f32 %v436, %v452
    %v454 = vsub.f32 1.0, %v453
    %v455 = vmul.f32 %v452, %v454
    %v456 = vadd.f32 %v452, %v455
    %vm457 = vweird.f32 %v436
    %vm458 = vweird.f32 %v452
    %vm459 = vmor %vm457, %vm458
    %v460 = vsel %vm459, %v452, %v456
    %v461 = vand.u32 2147483647, %v436
    %vm462 = vcmp.eq.f32.partialorder %v461, 8.507059e+37
    %v463 = vand.u32 %v436, 2147483648
    %v464 = vor.u32 1.1754944e-38, %v463
    %v465 = vsel %vm462, %v464, %v460
    %v466 = vmul.f32 1.0, %v465
    %v467 = vmul.f32 %v427, %v451
    %v468 = vmul.f32 %v428, %v466
    %v469 = vpack.c.bf16 %v468, %v467
    %v470 = vld [vmem:[%s5] sm:$0xf]
    %v471 = vld [vmem:[%s5 + $0x4] sm:$0xf]
    %v474 = vunpack.c.l.b16 %v470
    %v475 = vunpack.c.l.b16 %v471
    %v476 = vpack.c.b16 %v475, %v474
    %v479 = vsel %vm90, %v469, 0
    %481 = vmatpush.bf16.msra.mxu0 0
    %482 = vmatpush.bf16.msra.mxu0 0
    %483 = vmatpush.bf16.msra.mxu0 0
    %484 = vmatpush.bf16.msra.mxu0 0
    %485 = vmatpush.bf16.msra.mxu0 0
    %486 = vmatpush.bf16.msra.mxu0 0
    %487 = vmatpush.bf16.msra.mxu0 0
    %488 = vmatpush.bf16.msra.mxu0 %v476
    %489 = vmatmul.bf16.gmra.mxu0 %v479
    %v490 = vpop.f32.mrf.mxu0
    %v491 = vadd.f32 0.0, %v490
    %v492 = vpop.f32.mrf.mxu0
    %v493 = vadd.f32 0.0, %v492
    %494 = vdwg.mxu0
    %v495 = vsel %vm90, %v491, 0.0
    %v496 = vsel %vm90, %v493, 0.0
    %v497 = vadd.f32 %v495, %v496
    %v498 = vrot.slane %v497, 4
    %v499 = vadd.f32 %v497, %v498
    %v500 = vrot.slane %v499, 2
    %v501 = vadd.f32 %v499, %v500
    %v502 = vrot.slane %v501, 1
    %v503 = vadd.f32 %v501, %v502
    %v504 = vmul.f32 %v491, %v491
    %v505 = vmul.f32 %v493, %v493
    %v506 = vsel %vm90, %v504, 0.0
    %v507 = vsel %vm90, %v505, 0.0
    %v508 = vadd.f32 %v506, %v507
    %v509 = vrot.slane %v508, 4
    %v510 = vadd.f32 %v508, %v509
    %v511 = vrot.slane %v510, 2
    %v512 = vadd.f32 %v510, %v511
    %v513 = vrot.slane %v512, 1
    %v514 = vadd.f32 %v512, %v513
    %v515 = vmul.f32 %v503, 0.0625
    %v516 = vmul.f32 %v514, 0.0625
    %v517 = vmul.f32 %v515, %v515
    %v518 = vsub.f32 %v516, %v517
    %v519 = vmax.f32 %v518, 0.0
    %v520 = vadd.f32 %v519, 1e-05
    %v521 = vrsqrt.pop %v520
    %v522 = vmul.f32 %v521, %v520
    %v523 = vmul.f32 %v522, %v521
    %v524 = vmul.f32 0.5, %v523
    %v525 = vsub.f32 1.5, %v524
    %v526 = vmul.f32 %v521, %v525
    %vm527 = vweird.f32 %v520
    %vm528 = vweird.f32 %v521
    %vm529 = vmor %vm527, %vm528
    %v530 = vsel %vm529, %v521, %v526
    %v531 = vmul.f32 %v33, %v530
    %v532 = vmul.f32 %v515, %v531
    %v534 = vrot.slane %v532, 7
    %v536 = vsub.f32 %v33, %v534
    %v537 = vperm.slane %v531, 2
    %v538 = vmul.f32 %v491, %v537
    %v539 = vmul.f32 %v493, %v537
    %v540 = vperm.slane %v536, 3
    %v541 = vadd.f32 %v538, %v540
    %v542 = vadd.f32 %v539, %v540
    %v543 = vadd.f32 %v541, %v137
    %v544 = vadd.f32 %v542, %v138
    %v545 = vxor.u32 %v543, 2147483648
    %v546 = vxor.u32 %v544, 2147483648
    %v547 = vmul.f32 %v545, 1.442695
    %v548 = vpow.pop %v547
    %v549 = vmul.f32 %v546, 1.442695
    %v550 = vpow.pop %v549
    %v551 = vadd.f32 %v548, 1.0
    %v552 = vadd.f32 %v550, 1.0
    %v553 = vrcp.pop %v551
    %v554 = vmul.f32 %v551, %v553
    %v555 = vsub.f32 1.0, %v554
    %v556 = vmul.f32 %v553, %v555
    %v557 = vadd.f32 %v553, %v556
    %vm558 = vweird.f32 %v551
    %vm559 = vweird.f32 %v553
    %vm560 = vmor %vm558, %vm559
    %v561 = vsel %vm560, %v553, %v557
    %v562 = vand.u32 2147483647, %v551
    %vm563 = vcmp.eq.f32.partialorder %v562, 8.507059e+37
    %v564 = vand.u32 %v551, 2147483648
    %v565 = vor.u32 1.1754944e-38, %v564
    %v566 = vsel %vm563, %v565, %v561
    %v567 = vmul.f32 1.0, %v566
    %v568 = vrcp.pop %v552
    %v569 = vmul.f32 %v552, %v568
    %v570 = vsub.f32 1.0, %v569
    %v571 = vmul.f32 %v568, %v570
    %v572 = vadd.f32 %v568, %v571
    %vm573 = vweird.f32 %v552
    %vm574 = vweird.f32 %v568
    %vm575 = vmor %vm573, %vm574
    %v576 = vsel %vm575, %v568, %v572
    %v577 = vand.u32 2147483647, %v552
    %vm578 = vcmp.eq.f32.partialorder %v577, 8.507059e+37
    %v579 = vand.u32 %v552, 2147483648
    %v580 = vor.u32 1.1754944e-38, %v579
    %v581 = vsel %vm578, %v580, %v576
    %v582 = vmul.f32 1.0, %v581
    %v583 = vmul.f32 %v543, %v567
    %v584 = vmul.f32 %v544, %v582
    %585 = vst.msk [vmem:[#allocation2] sm:$0xff] %vm90, %v583
    %586 = vst.msk [vmem:[#allocation2 + $0x8] sm:$0xff] %vm90, %v584
    // Predicated region
    $region30: #{tpu_custom_call.1} parent=1 // pred_check
      _
    $region31: #{tpu_custom_call.1} parent=1 // pred_check_branch
      %588 = sbr.rel (0) target = $region33
    $region32: #{tpu_custom_call.1} parent=1 // pred_region
      %590 = vsyncadd [#allocation3], 0
      %s591 = sshll.u32 [#allocation2], 4
      %s592 = int_to_ptr.vmem [resolvable:$true] %s591
      %s593 = sshll.u32 %s7, 4
      %s594 = int_to_ptr.hbm [resolvable:$true] %s593
      %599 = dma.vmem_to_hbm [thread:$0]  %s592, 256, %s594, [#allocation3], 128, 128, 8
    $region33: #{tpu_custom_call.1} parent=1 // pred_fallthru
      _
    // Predicated region
    $region34: #{tpu_custom_call.1} parent=1 // pred_check
      _
    $region35: #{tpu_custom_call.1} parent=1 // pred_check_branch
      %601 = sbr.rel (0) target = $region37
    $region36: #{tpu_custom_call.1} parent=1 // pred_region
      %603 = dma.done [#allocation3], 256
    $region37: #{tpu_custom_call.1} parent=1 // pred_fallthru
      _
    %604 = vsyncpa [#allocation3], 1

</llo_original>
